<compile_context>
chip_gen: v6e
topology: v6e:2x2x1
jax: 0.10.0
libtpu: 0.0.40
codegen_flags: <defaults>
</compile_context>

<pallas_src>
import functools

import jax
import jax.numpy as jnp
from jax.experimental import pallas as pl
from jax.experimental.pallas import tpu as pltpu

HID = 128          # hidden width of ConditionalLinear layers
D_IN = 2           # input feature dim
D_OUT = 2          # output feature dim
KP = 128           # padded K of the fused first matmul; requires num_levels + 3 <= KP


def _round_up(n, m):
    return ((n + m - 1) // m) * m


def _default_use_bf16_eup():
    """bf16 EUP/VPU path exists on v6e and newer; keep f32 on v5e and older chips."""
    try:
        kind = jax.devices()[0].device_kind.lower()
    except Exception:
        return False
    return not any(v in kind for v in ("v2", "v3", "v4", "v5"))


def _softplus(z, use_bf16_eup):
    """Numerically stable softplus: max(z, 0) + log(1 + exp(-|z|)) (z is f32)."""
    if use_bf16_eup:
        # exp/log on bf16 (2x EUP throughput on v6e/v7x); result is cast to bf16
        # for the following MXU op anyway, so precision loss is negligible.
        t = (-jnp.abs(z)).astype(jnp.bfloat16)
        tail = jnp.log(1.0 + jnp.exp(t)).astype(jnp.float32)
    else:
        tail = jnp.log(1.0 + jnp.exp(-jnp.abs(z)))
    return jnp.maximum(z, 0.0) + tail


def _forward_math(x, y2, wbig, e2p, w2, b2, w3t, b3t, num_levels, use_bf16_eup):
    """Shared math used by both the Pallas kernel body and the mirrored JAX reference.

    x:   (TB, 2) f32,     y2: (TB, 1) i32
    wbig:(KP, 2*HID) bf16 = [e1 | W1;b1]      e2p: (KP, HID) bf16 = [e2]
    w2:  (HID, HID) bf16, b2: (1, HID) f32
    w3t: (D_OUT, HID) bf16 (pre-transposed),  b3t: (D_OUT, 1) f32
    Returns (D_OUT, TB) f32 (lane-dense / transposed output).
    """
    tb = x.shape[0]
    col = jax.lax.broadcasted_iota(jnp.int32, (tb, KP), 1)

    # Fused left operand A = [one_hot(y) | x0 | x1 | 1 | 0...], one select chain.
    onehot_or_bias = jnp.logical_or(col == y2, col == num_levels + 2).astype(jnp.float32)
    a = jnp.where(col == num_levels, x[:, 0:1],
                  jnp.where(col == num_levels + 1, x[:, 1:2], onehot_or_bias))
    a = a.astype(jnp.bfloat16)

    # One full 256-wide MXU pass: [gamma1 | x@W1 + b1]  of shape (TB, 256).
    fused = jnp.dot(a, wbig, preferred_element_type=jnp.float32)
    gamma1 = fused[:, 0:HID]
    h = fused[:, HID:2 * HID]                     # x @ W1 + b1
    h = _softplus(gamma1 * h, use_bf16_eup)       # lin1 + softplus

    h = jnp.dot(h.astype(jnp.bfloat16), w2, preferred_element_type=jnp.float32) + b2
    gamma2 = jnp.dot(a, e2p, preferred_element_type=jnp.float32)   # issued just before gating
    h = _softplus(gamma2 * h, use_bf16_eup)       # lin2 + softplus

    # lin3, transposed: (D_OUT, TB) = w3^T @ h^T  (+ b3 as a column) -> lane-dense stores.
    out_t = jax.lax.dot_general(w3t, h.astype(jnp.bfloat16),
                                (((1,), (1,)), ((), ())),
                                preferred_element_type=jnp.float32)
    return out_t + b3t


def conditional_model_kernel(x_ref, y_ref, wbig_ref, e2_ref, w2_ref, b2_ref,
                             w3t_ref, b3t_ref, o_ref, *, num_levels, use_bf16_eup):
    o_ref[...] = _forward_math(
        x_ref[...], y_ref[...], wbig_ref[...], e2_ref[...], w2_ref[...], b2_ref[...],
        w3t_ref[...], b3t_ref[...], num_levels, use_bf16_eup)


def init_params(key, num_levels):
    """Deterministic synthetic parameters matching the module's shapes.

    Linear weights stored as [in, out] (transposed from PyTorch). Embedding tables
    uniform in [0, 1), mirroring `embed.weight.data.uniform_()`.
    """
    ks = jax.random.split(key, 8)

    def lin_init(kw, kb, fan_in, fan_out):
        bound = 1.0 / jnp.sqrt(fan_in)
        w = jax.random.uniform(kw, (fan_in, fan_out), jnp.float32, -bound, bound)
        b = jax.random.uniform(kb, (1, fan_out), jnp.float32, -bound, bound)
        return w, b

    w1, b1 = lin_init(ks[0], ks[1], D_IN, HID)
    w2, b2 = lin_init(ks[2], ks[3], HID, HID)
    w3, b3 = lin_init(ks[4], ks[5], HID, D_OUT)
    e1 = jax.random.uniform(ks[6], (num_levels, HID), jnp.float32, 0.0, 1.0)
    e2 = jax.random.uniform(ks[7], (num_levels, HID), jnp.float32, 0.0, 1.0)
    return dict(w1=w1, b1=b1, w2=w2, b2=b2, w3=w3, b3=b3, e1=e1, e2=e2)


def prepare_kernel_params(p, num_levels):
    """Pack kernel-side params: split block matrices + bf16 MXU operands."""
    assert num_levels >= 1, "need at least one embedding level (padding uses level 0)"
    assert num_levels + 3 <= KP, "num_levels too large for fused KP=128 layout"
    wbig = jnp.zeros((KP, 2 * HID), jnp.float32)
    wbig = wbig.at[:num_levels, 0:HID].set(p["e1"])
    wbig = wbig.at[num_levels:num_levels + 2, HID:2 * HID].set(p["w1"])
    wbig = wbig.at[num_levels + 2, HID:2 * HID].set(p["b1"][0])
    e2p = jnp.zeros((KP, HID), jnp.float32).at[:num_levels].set(p["e2"])
    return dict(
        wbig=wbig.astype(jnp.bfloat16),
        e2p=e2p.astype(jnp.bfloat16),
        w2=p["w2"].astype(jnp.bfloat16),
        b2=p["b2"],                             # biases / elementwise stay f32
        w3t=p["w3"].T.astype(jnp.bfloat16),     # (D_OUT, HID) for transposed last matmul
        b3t=p["b3"].T,                          # (D_OUT, 1)
    )


def _choose_tb(batch, tb_req):
    """Pick the batch tile: big tiles to amortize per-step overhead, >=2 grid steps
    for batches >= 256 (feeds both v7x TensorCores), lane-aligned when multi-tile."""
    b8 = _round_up(max(batch, 1), 8)
    tb_req = max(8, (tb_req // 8) * 8)
    if b8 <= tb_req:
        if b8 >= 256:
            return _round_up((b8 + 1) // 2, 128)   # split into >=2 lane-aligned tiles
        return b8                                   # tiny batch: single tile
    return max(128, (tb_req // 128) * 128)          # multi-tile: lane-align tb


def conditional_model_forward(x, y, kparams, num_levels, *, tb=2048, use_bf16_eup=None):
    """x: [B, 2] f32, y: [B] int32 level ids -> [B, 2] f32."""
    assert num_levels >= 1
    if use_bf16_eup is None:
        use_bf16_eup = _default_use_bf16_eup()

    B = x.shape[0]
    tb = _choose_tb(B, tb)
    Bp = _round_up(_round_up(B, 8), tb)
    if Bp != B:
        x = jnp.pad(x, ((0, Bp - B), (0, 0)))
        y = jnp.pad(y, ((0, Bp - B),))      # pad with level 0 (valid); rows sliced off below
    y2 = y.reshape(Bp, 1).astype(jnp.int32)

    grid = (Bp // tb,)
    kernel = functools.partial(conditional_model_kernel, num_levels=num_levels,
                               use_bf16_eup=use_bf16_eup)

    flops = 2 * Bp * (KP * 2 * HID + KP * HID + HID * HID + HID * D_OUT)
    transcendentals = 4 * Bp * HID          # exp + log per softplus element, 2 layers
    bytes_accessed = (Bp * (D_IN * 4 + 4 + D_OUT * 4)
                      + (kparams["wbig"].size + kparams["e2p"].size
                         + kparams["w2"].size + kparams["w3t"].size) * 2
                      + (kparams["b2"].size + kparams["b3t"].size) * 4)

    out_t = pl.pallas_call(
        kernel,
        out_shape=jax.ShapeDtypeStruct((D_OUT, Bp), jnp.float32),
        grid_spec=pltpu.PrefetchScalarGridSpec(
            num_scalar_prefetch=0,
            grid=grid,
            in_specs=[
                pl.BlockSpec((tb, D_IN), lambda i: (i, 0)),        # x: tiled over batch
                pl.BlockSpec((tb, 1), lambda i: (i, 0)),           # y: tiled over batch
                pl.BlockSpec((KP, 2 * HID), lambda i: (0, 0)),     # [e1 | W1;b1]: resident
                pl.BlockSpec((KP, HID), lambda i: (0, 0)),         # [e2]: resident
                pl.BlockSpec((HID, HID), lambda i: (0, 0)),        # W2: resident
                pl.BlockSpec((1, HID), lambda i: (0, 0)),          # b2: resident
                pl.BlockSpec((D_OUT, HID), lambda i: (0, 0)),      # W3^T: resident
                pl.BlockSpec((D_OUT, 1), lambda i: (0, 0)),        # b3^T: resident
            ],
            out_specs=pl.BlockSpec((D_OUT, tb), lambda i: (0, i)), # lane-dense output
        ),
        compiler_params=pltpu.CompilerParams(
            dimension_semantics=("parallel",),       # shard batch tiles across TCs (v7x)
            vmem_limit_bytes=32 << 20),               # clears v5e's 16 MiB scoped default
        cost_estimate=pl.CostEstimate(
            flops=flops, transcendentals=transcendentals, bytes_accessed=bytes_accessed),
    )(x, y2, kparams["wbig"], kparams["e2p"], kparams["w2"], kparams["b2"],
      kparams["w3t"], kparams["b3t"])
    return out_t[:, :B].T


def reference_forward_f32(x, y, p):
    """Pure-JAX f32 reference mirroring the PyTorch forward."""
    g1 = p["e1"][y]
    g2 = p["e2"][y]
    h = jax.nn.softplus(g1 * (x @ p["w1"] + p["b1"]))
    h = jax.nn.softplus(g2 * (h @ p["w2"] + p["b2"]))
    return h @ p["w3"] + p["b3"]


def reference_forward_mirrored(x, y, kparams, num_levels, use_bf16_eup):
    """Reference that mirrors the kernel's bf16-operand / f32-accumulate math exactly."""
    y2 = y.reshape(-1, 1).astype(jnp.int32)
    out_t = _forward_math(x, y2, kparams["wbig"], kparams["e2p"], kparams["w2"],
                          kparams["b2"], kparams["w3t"], kparams["b3t"],
                          num_levels, use_bf16_eup)
    return out_t.T


def _check(batch, num_levels, params, kparams, key, use_bf16_eup):
    kx, ky = jax.random.split(key, 2)
    x = jax.random.normal(kx, (batch, D_IN), jnp.float32)
    y = jax.random.randint(ky, (batch,), 0, num_levels, jnp.int32)

    out = conditional_model_forward(x, y, kparams, num_levels, use_bf16_eup=use_bf16_eup)
    out = jax.block_until_ready(out)
    assert out.shape == (batch, D_OUT)

    # Exact-math parity (same bf16 operands / transcendental dtype, f32 accumulation).
    ref_mirror = reference_forward_mirrored(x, y, kparams, num_levels, use_bf16_eup)
    assert jnp.allclose(out, ref_mirror, atol=1e-2, rtol=1e-2), \
        "Pallas kernel mismatch vs bf16-mirrored reference"

    # Module-level semantics vs the f32 reference (tolerance loosened for bf16 MXU/EUP).
    ref_f32 = reference_forward_f32(x, y, params)
    assert jnp.allclose(out, ref_f32, atol=5e-2, rtol=5e-2), \
        "Pallas kernel mismatch vs f32 module reference"


if __name__ == "__main__":
    num_levels = 10

    key = jax.random.PRNGKey(0)
    kparam, kdata1, kdata2 = jax.random.split(key, 3)

    params = init_params(kparam, num_levels)
    kparams = prepare_kernel_params(params, num_levels)
    use_bf16_eup = _default_use_bf16_eup()

    _check(8, num_levels, params, kparams, kdata1, use_bf16_eup)     # single-tile path
    _check(300, num_levels, params, kparams, kdata2, use_bf16_eup)   # multi-tile + padding path

    print("KERNEL_OK")
</pallas_src>

<mosaic_0001>
module attributes {stable_mosaic.version = 11 : i64} {
  func.func @conditional_model_kernel(%arg0: i32, %arg1: memref<8x2xf32, #tpu.memory_space<vmem>>, %arg2: memref<8x1xi32, #tpu.memory_space<vmem>>, %arg3: memref<128x256xbf16, #tpu.memory_space<vmem>>, %arg4: memref<128x128xbf16, #tpu.memory_space<vmem>>, %arg5: memref<128x128xbf16, #tpu.memory_space<vmem>>, %arg6: memref<1x128xf32, #tpu.memory_space<vmem>>, %arg7: memref<2x128xbf16, #tpu.memory_space<vmem>>, %arg8: memref<2x1xf32, #tpu.memory_space<vmem>>, %arg9: memref<2x8xf32, #tpu.memory_space<vmem>>) attributes {dimension_semantics = [#tpu.dimension_semantics<parallel>], iteration_bounds = array<i64: 1>, scalar_prefetch = 0 : i64, scratch_operands = 0 : i64, tpu.core_type = #tpu.core_type<tc>, window_params = [{transform_indices = @transform_0, window_bounds = array<i64: 8, 2>}, {transform_indices = @transform_1, window_bounds = array<i64: 8, 1>}, {pipeline_mode = #tpu.pipeline_mode<synchronous>, transform_indices = @transform_2, window_bounds = array<i64: 128, 256>}, {pipeline_mode = #tpu.pipeline_mode<synchronous>, transform_indices = @transform_3, window_bounds = array<i64: 128, 128>}, {pipeline_mode = #tpu.pipeline_mode<synchronous>, transform_indices = @transform_4, window_bounds = array<i64: 128, 128>}, {pipeline_mode = #tpu.pipeline_mode<synchronous>, transform_indices = @transform_5, window_bounds = array<i64: 1, 128>}, {pipeline_mode = #tpu.pipeline_mode<synchronous>, transform_indices = @transform_6, window_bounds = array<i64: 2, 128>}, {pipeline_mode = #tpu.pipeline_mode<synchronous>, transform_indices = @transform_7, window_bounds = array<i64: 2, 1>}, {transform_indices = @transform_8, window_bounds = array<i64: 2, 8>}]} {
    %c0 = arith.constant 0 : index
    %c0_0 = arith.constant 0 : index
    %0 = vector.load %arg1[%c0, %c0_0] : memref<8x2xf32, #tpu.memory_space<vmem>>, vector<8x2xf32>
    %c0_1 = arith.constant 0 : index
    %c0_2 = arith.constant 0 : index
    %1 = vector.load %arg2[%c0_1, %c0_2] : memref<8x1xi32, #tpu.memory_space<vmem>>, vector<8x1xi32>
    %c0_3 = arith.constant 0 : index
    %c0_4 = arith.constant 0 : index
    %2 = vector.load %arg3[%c0_3, %c0_4] : memref<128x256xbf16, #tpu.memory_space<vmem>>, vector<128x256xbf16>
    %c0_5 = arith.constant 0 : index
    %c0_6 = arith.constant 0 : index
    %3 = vector.load %arg4[%c0_5, %c0_6] : memref<128x128xbf16, #tpu.memory_space<vmem>>, vector<128x128xbf16>
    %c0_7 = arith.constant 0 : index
    %c0_8 = arith.constant 0 : index
    %4 = vector.load %arg5[%c0_7, %c0_8] : memref<128x128xbf16, #tpu.memory_space<vmem>>, vector<128x128xbf16>
    %c0_9 = arith.constant 0 : index
    %c0_10 = arith.constant 0 : index
    %5 = vector.load %arg6[%c0_9, %c0_10] : memref<1x128xf32, #tpu.memory_space<vmem>>, vector<1x128xf32>
    %c0_11 = arith.constant 0 : index
    %c0_12 = arith.constant 0 : index
    %6 = vector.load %arg7[%c0_11, %c0_12] : memref<2x128xbf16, #tpu.memory_space<vmem>>, vector<2x128xbf16>
    %c0_13 = arith.constant 0 : index
    %c0_14 = arith.constant 0 : index
    %7 = vector.load %arg8[%c0_13, %c0_14] : memref<2x1xf32, #tpu.memory_space<vmem>>, vector<2x1xf32>
    %8 = tpu.iota {dimensions = array<i32: 1>} : vector<8x128xi32>
    %9 = vector.broadcast %1 : vector<8x1xi32> to vector<8x128xi32>
    %10 = arith.cmpi eq, %8, %9 : vector<8x128xi32>
    %c12_i32 = arith.constant 12 : i32
    %11 = vector.broadcast %c12_i32 : i32 to vector<8x128xi32>
    %12 = arith.cmpi eq, %8, %11 : vector<8x128xi32>
    %13 = arith.ori %10, %12 : vector<8x128xi1>
    %14 = arith.extui %13 : vector<8x128xi1> to vector<8x128xi32>
    %15 = arith.sitofp %14 : vector<8x128xi32> to vector<8x128xf32>
    %c10_i32 = arith.constant 10 : i32
    %16 = vector.broadcast %c10_i32 : i32 to vector<8x128xi32>
    %17 = arith.cmpi eq, %8, %16 : vector<8x128xi32>
    %18 = vector.extract_strided_slice %0 {offsets = [0, 0], sizes = [8, 1], strides = [1, 1]} : vector<8x2xf32> to vector<8x1xf32>
    %c11_i32 = arith.constant 11 : i32
    %19 = vector.broadcast %c11_i32 : i32 to vector<8x128xi32>
    %20 = arith.cmpi eq, %8, %19 : vector<8x128xi32>
    %21 = vector.extract_strided_slice %0 {offsets = [0, 1], sizes = [8, 1], strides = [1, 1]} : vector<8x2xf32> to vector<8x1xf32>
    %22 = vector.shape_cast %21 : vector<8x1xf32> to vector<8x1xf32>
    %23 = vector.broadcast %22 : vector<8x1xf32> to vector<8x128xf32>
    %24 = arith.select %20, %23, %15 : vector<8x128xi1>, vector<8x128xf32>
    %25 = vector.shape_cast %18 : vector<8x1xf32> to vector<8x1xf32>
    %26 = vector.broadcast %25 : vector<8x1xf32> to vector<8x128xf32>
    %27 = arith.select %17, %26, %24 : vector<8x128xi1>, vector<8x128xf32>
    %28 = arith.truncf %27 : vector<8x128xf32> to vector<8x128xbf16>
    %cst = arith.constant dense<0.000000e+00> : vector<8x256xf32>
    %29 = tpu.matmul %28, %2, %cst {dimension_numbers = #tpu.dot_dimension_numbers<[1], [0], [0], [1], [0, 0, 1, 1], [], []>} : vector<8x128xbf16>, vector<128x256xbf16>, vector<8x256xf32> -> vector<8x256xf32>
    %30 = vector.extract_strided_slice %29 {offsets = [0, 0], sizes = [8, 128], strides = [1, 1]} : vector<8x256xf32> to vector<8x128xf32>
    %31 = vector.extract_strided_slice %29 {offsets = [0, 128], sizes = [8, 128], strides = [1, 1]} : vector<8x256xf32> to vector<8x128xf32>
    %32 = arith.mulf %30, %31 : vector<8x128xf32>
    %33 = math.absf %32 : vector<8x128xf32>
    %cst_15 = arith.constant 0.000000e+00 : f32
    %34 = vector.broadcast %cst_15 : f32 to vector<8x128xf32>
    %35 = arith.subf %34, %33 : vector<8x128xf32>
    %36 = arith.truncf %35 : vector<8x128xf32> to vector<8x128xbf16>
    %37 = math.exp %36 : vector<8x128xbf16>
    %cst_16 = arith.constant 1.000000e+00 : bf16
    %38 = vector.broadcast %cst_16 : bf16 to vector<8x128xbf16>
    %39 = arith.addf %38, %37 : vector<8x128xbf16>
    %40 = math.log %39 : vector<8x128xbf16>
    %41 = arith.extf %40 : vector<8x128xbf16> to vector<8x128xf32>
    %cst_17 = arith.constant 0.000000e+00 : f32
    %42 = vector.broadcast %cst_17 : f32 to vector<8x128xf32>
    %43 = arith.maximumf %32, %42 : vector<8x128xf32>
    %44 = arith.addf %43, %41 : vector<8x128xf32>
    %45 = arith.truncf %44 : vector<8x128xf32> to vector<8x128xbf16>
    %cst_18 = arith.constant dense<0.000000e+00> : vector<8x128xf32>
    %46 = tpu.matmul %45, %4, %cst_18 {dimension_numbers = #tpu.dot_dimension_numbers<[1], [0], [0], [1], [0, 0, 1, 1], [], []>} : vector<8x128xbf16>, vector<128x128xbf16>, vector<8x128xf32> -> vector<8x128xf32>
    %47 = vector.broadcast %5 : vector<1x128xf32> to vector<8x128xf32>
    %48 = arith.addf %46, %47 : vector<8x128xf32>
    %cst_19 = arith.constant dense<0.000000e+00> : vector<8x128xf32>
    %49 = tpu.matmul %28, %3, %cst_19 {dimension_numbers = #tpu.dot_dimension_numbers<[1], [0], [0], [1], [0, 0, 1, 1], [], []>} : vector<8x128xbf16>, vector<128x128xbf16>, vector<8x128xf32> -> vector<8x128xf32>
    %50 = arith.mulf %49, %48 : vector<8x128xf32>
    %51 = math.absf %50 : vector<8x128xf32>
    %cst_20 = arith.constant 0.000000e+00 : f32
    %52 = vector.broadcast %cst_20 : f32 to vector<8x128xf32>
    %53 = arith.subf %52, %51 : vector<8x128xf32>
    %54 = arith.truncf %53 : vector<8x128xf32> to vector<8x128xbf16>
    %55 = math.exp %54 : vector<8x128xbf16>
    %cst_21 = arith.constant 1.000000e+00 : bf16
    %56 = vector.broadcast %cst_21 : bf16 to vector<8x128xbf16>
    %57 = arith.addf %56, %55 : vector<8x128xbf16>
    %58 = math.log %57 : vector<8x128xbf16>
    %59 = arith.extf %58 : vector<8x128xbf16> to vector<8x128xf32>
    %cst_22 = arith.constant 0.000000e+00 : f32
    %60 = vector.broadcast %cst_22 : f32 to vector<8x128xf32>
    %61 = arith.maximumf %50, %60 : vector<8x128xf32>
    %62 = arith.addf %61, %59 : vector<8x128xf32>
    %63 = arith.truncf %62 : vector<8x128xf32> to vector<8x128xbf16>
    %cst_23 = arith.constant dense<0.000000e+00> : vector<2x8xf32>
    %64 = tpu.matmul %6, %63, %cst_23 {dimension_numbers = #tpu.dot_dimension_numbers<[1], [1], [0], [0], [0, 0, 1, 0], [], []>} : vector<2x128xbf16>, vector<8x128xbf16>, vector<2x8xf32> -> vector<2x8xf32>
    %65 = vector.broadcast %7 : vector<2x1xf32> to vector<2x8xf32>
    %66 = arith.addf %64, %65 : vector<2x8xf32>
    %c0_24 = arith.constant 0 : index
    %c0_25 = arith.constant 0 : index
    %67 = vector.load %arg9[%c0_24, %c0_25] : memref<2x8xf32, #tpu.memory_space<vmem>>, vector<2x8xf32>
    tpu.vector_store %arg9[%c0_24, %c0_25], %66 {strides = array<i32>} : memref<2x8xf32, #tpu.memory_space<vmem>>, vector<2x8xf32>,
    return
  }
  func.func @transform_0(%arg0: i32) -> (i32, i32) {
    %c0_i32 = arith.constant 0 : i32
    %c0_i32_0 = arith.constant 0 : i32
    return %arg0, %c0_i32 : i32, i32
  }
  func.func @transform_1(%arg0: i32) -> (i32, i32) {
    %c0_i32 = arith.constant 0 : i32
    %c0_i32_0 = arith.constant 0 : i32
    return %arg0, %c0_i32 : i32, i32
  }
  func.func @transform_2(%arg0: i32) -> (i32, i32) {
    %c0_i32 = arith.constant 0 : i32
    %c0_i32_0 = arith.constant 0 : i32
    %c0_i32_1 = arith.constant 0 : i32
    return %c0_i32, %c0_i32_0 : i32, i32
  }
  func.func @transform_3(%arg0: i32) -> (i32, i32) {
    %c0_i32 = arith.constant 0 : i32
    %c0_i32_0 = arith.constant 0 : i32
    %c0_i32_1 = arith.constant 0 : i32
    return %c0_i32, %c0_i32_0 : i32, i32
  }
  func.func @transform_4(%arg0: i32) -> (i32, i32) {
    %c0_i32 = arith.constant 0 : i32
    %c0_i32_0 = arith.constant 0 : i32
    %c0_i32_1 = arith.constant 0 : i32
    return %c0_i32, %c0_i32_0 : i32, i32
  }
  func.func @transform_5(%arg0: i32) -> (i32, i32) {
    %c0_i32 = arith.constant 0 : i32
    %c0_i32_0 = arith.constant 0 : i32
    %c0_i32_1 = arith.constant 0 : i32
    return %c0_i32, %c0_i32_0 : i32, i32
  }
  func.func @transform_6(%arg0: i32) -> (i32, i32) {
    %c0_i32 = arith.constant 0 : i32
    %c0_i32_0 = arith.constant 0 : i32
    %c0_i32_1 = arith.constant 0 : i32
    return %c0_i32, %c0_i32_0 : i32, i32
  }
  func.func @transform_7(%arg0: i32) -> (i32, i32) {
    %c0_i32 = arith.constant 0 : i32
    %c0_i32_0 = arith.constant 0 : i32
    %c0_i32_1 = arith.constant 0 : i32
    return %c0_i32, %c0_i32_0 : i32, i32
  }
  func.func @transform_8(%arg0: i32) -> (i32, i32) {
    %c0_i32 = arith.constant 0 : i32
    %c0_i32_0 = arith.constant 0 : i32
    return %c0_i32, %arg0 : i32, i32
  }
}

</mosaic_0001>

<llo_original>
// kernel: tpu_custom_call.1
$region0: #{tpu_custom_call.1}
  #allocation0 [shape = 'u32[]', space=smem, size = 0x4, offset = 0x4, fixed_abs, tag = 'smem constant byte address 0x4 - core index']
  #allocation1 [shape = 'u32[144,128]{1,0:T(1,128)}', space=vmem, size = 0x12000, scoped, tag = 'internal scratch']
  %s0 = inlined_call_operand.vmem [shape: f32[8,2], index: 0, kind: input, shape index: {}]
  %s1 = inlined_call_operand.vmem [shape: s32[8,1], index: 1, kind: input, shape index: {}]
  %s2 = inlined_call_operand.hbm [shape: bf16[128,256], index: 2, kind: input, shape index: {}]
  %s3 = inlined_call_operand.hbm [shape: bf16[128,128], index: 3, kind: input, shape index: {}]
  %s4 = inlined_call_operand.hbm [shape: bf16[128,128], index: 4, kind: input, shape index: {}]
  %s5 = inlined_call_operand.vmem [shape: f32[1,128], index: 5, kind: input, shape index: {}]
  %s6 = inlined_call_operand.vmem [shape: bf16[2,128], index: 6, kind: input, shape index: {}]
  %s7 = inlined_call_operand.vmem [shape: f32[2,1], index: 7, kind: input, shape index: {}]
  %s8 = inlined_call_operand.hbm [shape: f32[2,8], index: 8, kind: output, shape index: {}]
  %s9 = sld [smem:[#allocation0]]
  $region54: #{tpu_custom_call.1} parent=0
    _
  %s11 = ssub.s32 1, %s9
  %s12 = scalar_select 0, %s11, %s9
  $region1: #{tpu_custom_call.1} parent=0
    #allocation2 [shape = 'u8[65536]{0}', space=vmem, size = 0x10000, scoped, tag = 'input window, operand 2, single buffered']
    #allocation3 [shape = 's32[1]{0}', space=sflag, size = 0x4, scoped, tag = 'scoped memory for tpu_custom_call.1']
    #allocation4 [shape = 's32[1]{0}', space=sflag, size = 0x4, scoped, tag = 'scoped memory for tpu_custom_call.1']
    #allocation5 [shape = 'u8[32768]{0}', space=vmem, size = 0x8000, scoped, tag = 'input window, operand 3, single buffered']
    #allocation6 [shape = 's32[1]{0}', space=sflag, size = 0x4, scoped, tag = 'scoped memory for tpu_custom_call.1']
    #allocation7 [shape = 'u8[32768]{0}', space=vmem, size = 0x8000, scoped, tag = 'input window, operand 4, single buffered']
    #allocation8 [shape = 'u8[1024]{0}', space=vmem, size = 0x400, scoped, tag = 'output window, operand 0, single buffered']
    %13 = vsyncpa [#allocation3], 0
    %14 = vsyncpa [#allocation6], 0
    %15 = vsyncpa [#allocation4], 0
    // Predicated region
    $region2: #{tpu_custom_call.1} parent=1 // pred_check
      _
    $region3: #{tpu_custom_call.1} parent=1 // pred_check_branch
      %17 = sbr.rel (0) target = $region5
    $region4: #{tpu_custom_call.1} parent=1 // pred_region
      _
    $region5: #{tpu_custom_call.1} parent=1 // pred_fallthru
      _
    // Predicated region
    $region6: #{tpu_custom_call.1} parent=1 // pred_check
      _
    $region7: #{tpu_custom_call.1} parent=1 // pred_check_branch
      %19 = sbr.rel (0) target = $region9
    $region8: #{tpu_custom_call.1} parent=1 // pred_region
      _
    $region9: #{tpu_custom_call.1} parent=1 // pred_fallthru
      _
    // Predicated region
    $region10: #{tpu_custom_call.1} parent=1 // pred_check
      _
    $region11: #{tpu_custom_call.1} parent=1 // pred_check_branch
      %21 = sbr.rel (0) target = $region13
    $region12: #{tpu_custom_call.1} parent=1 // pred_region
      %s23 = ssub.s32 2048, 2048
      %24 = vsyncadd [#allocation3], %s23
      %s25 = sshll.u32 [#allocation2], 4
      %s26 = int_to_ptr.vmem [resolvable:$true] %s25
      %31 = dma.hbm_to_vmem [thread:$0]  %s2, 2048, %s26, [#allocation3], 128, 128, 8
    $region13: #{tpu_custom_call.1} parent=1 // pred_fallthru
      _
    // Predicated region
    $region14: #{tpu_custom_call.1} parent=1 // pred_check
      _
    $region15: #{tpu_custom_call.1} parent=1 // pred_check_branch
      %33 = sbr.rel (0) target = $region17
    $region16: #{tpu_custom_call.1} parent=1 // pred_region
      %s35 = ssub.s32 1024, 1024
      %36 = vsyncadd [#allocation6], %s35
      %s37 = sshll.u32 [#allocation5], 4
      %s38 = int_to_ptr.vmem [resolvable:$true] %s37
      %43 = dma.hbm_to_vmem [thread:$0]  %s3, 1024, %s38, [#allocation6], 64, 64, 4
    $region17: #{tpu_custom_call.1} parent=1 // pred_fallthru
      _
    // Predicated region
    $region18: #{tpu_custom_call.1} parent=1 // pred_check
      _
    $region19: #{tpu_custom_call.1} parent=1 // pred_check_branch
      %45 = sbr.rel (0) target = $region21
    $region20: #{tpu_custom_call.1} parent=1 // pred_region
      %s47 = ssub.s32 1024, 1024
      %48 = vsyncadd [#allocation6], %s47
      %s49 = sshll.u32 [#allocation7], 4
      %s50 = int_to_ptr.vmem [resolvable:$true] %s49
      %55 = dma.hbm_to_vmem [thread:$0]  %s4, 1024, %s50, [#allocation6], 64, 64, 4
    $region21: #{tpu_custom_call.1} parent=1 // pred_fallthru
      _
    // Predicated region
    $region22: #{tpu_custom_call.1} parent=1 // pred_check
      _
    $region23: #{tpu_custom_call.1} parent=1 // pred_check_branch
      %57 = sbr.rel (0) target = $region25
    $region24: #{tpu_custom_call.1} parent=1 // pred_region
      _
    $region25: #{tpu_custom_call.1} parent=1 // pred_fallthru
      _
    // Predicated region
    $region26: #{tpu_custom_call.1} parent=1 // pred_check
      _
    $region27: #{tpu_custom_call.1} parent=1 // pred_check_branch
      %59 = sbr.rel (0) target = $region29
    $region28: #{tpu_custom_call.1} parent=1 // pred_region
      _
    $region29: #{tpu_custom_call.1} parent=1 // pred_fallthru
      _
    // Predicated region
    $region30: #{tpu_custom_call.1} parent=1 // pred_check
      _
    $region31: #{tpu_custom_call.1} parent=1 // pred_check_branch
      %61 = sbr.rel (0) target = $region33
    $region32: #{tpu_custom_call.1} parent=1 // pred_region
      _
    $region33: #{tpu_custom_call.1} parent=1 // pred_fallthru
      _
    // Predicated region
    $region34: #{tpu_custom_call.1} parent=1 // pred_check
      _
    $region35: #{tpu_custom_call.1} parent=1 // pred_check_branch
      %63 = sbr.rel (0) target = $region37
    $region36: #{tpu_custom_call.1} parent=1 // pred_region
      %64 = dma.done [#allocation3], 2048
    $region37: #{tpu_custom_call.1} parent=1 // pred_fallthru
      _
    // Predicated region
    $region38: #{tpu_custom_call.1} parent=1 // pred_check
      _
    $region39: #{tpu_custom_call.1} parent=1 // pred_check_branch
      %66 = sbr.rel (0) target = $region41
    $region40: #{tpu_custom_call.1} parent=1 // pred_region
      %67 = dma.done [#allocation6], 1024
    $region41: #{tpu_custom_call.1} parent=1 // pred_fallthru
      _
    // Predicated region
    $region42: #{tpu_custom_call.1} parent=1 // pred_check
      _
    $region43: #{tpu_custom_call.1} parent=1 // pred_check_branch
      %69 = sbr.rel (0) target = $region45
    $region44: #{tpu_custom_call.1} parent=1 // pred_region
      %70 = dma.done [#allocation6], 1024
    $region45: #{tpu_custom_call.1} parent=1 // pred_fallthru
      _
    %v73 = vld [vmem:[%s0] sm:$0xff]
    %v74 = vld [vmem:[%s1] sm:$0xff]
    %v75 = vld [vmem:[#allocation2] sm:$0xff]
    %v76 = vld [vmem:[#allocation2 + $0x8] sm:$0xff]
    %v77 = vld [vmem:[#allocation2 + $0x10] sm:$0xff]
    %v78 = vld [vmem:[#allocation2 + $0x18] sm:$0xff]
    %v79 = vld [vmem:[#allocation2 + $0x20] sm:$0xff]
    %v80 = vld [vmem:[#allocation2 + $0x28] sm:$0xff]
    %v81 = vld [vmem:[#allocation2 + $0x30] sm:$0xff]
    %v82 = vld [vmem:[#allocation2 + $0x38] sm:$0xff]
    %v83 = vld [vmem:[#allocation2 + $0x40] sm:$0xff]
    %v84 = vld [vmem:[#allocation2 + $0x48] sm:$0xff]
    %v85 = vld [vmem:[#allocation2 + $0x50] sm:$0xff]
    %v86 = vld [vmem:[#allocation2 + $0x58] sm:$0xff]
    %v87 = vld [vmem:[#allocation2 + $0x60] sm:$0xff]
    %v88 = vld [vmem:[#allocation2 + $0x68] sm:$0xff]
    %v89 = vld [vmem:[#allocation2 + $0x70] sm:$0xff]
    %v90 = vld [vmem:[#allocation2 + $0x78] sm:$0xff]
    %v91 = vld [vmem:[#allocation5] sm:$0xf]
    %v92 = vld [vmem:[#allocation5 + $0x4] sm:$0xf]
    %v93 = vld [vmem:[#allocation5 + $0x8] sm:$0xf]
    %v94 = vld [vmem:[#allocation5 + $0xc] sm:$0xf]
    %v95 = vld [vmem:[#allocation5 + $0x10] sm:$0xf]
    %v96 = vld [vmem:[#allocation5 + $0x14] sm:$0xf]
    %v97 = vld [vmem:[#allocation5 + $0x18] sm:$0xf]
    %v98 = vld [vmem:[#allocation5 + $0x1c] sm:$0xf]
    %v99 = vld [vmem:[#allocation5 + $0x20] sm:$0xf]
    %v100 = vld [vmem:[#allocation5 + $0x24] sm:$0xf]
    %v101 = vld [vmem:[#allocation5 + $0x28] sm:$0xf]
    %v102 = vld [vmem:[#allocation5 + $0x2c] sm:$0xf]
    %v103 = vld [vmem:[#allocation5 + $0x30] sm:$0xf]
    %v104 = vld [vmem:[#allocation5 + $0x34] sm:$0xf]
    %v105 = vld [vmem:[#allocation5 + $0x38] sm:$0xf]
    %v106 = vld [vmem:[#allocation5 + $0x3c] sm:$0xf]
    %v107 = vld [vmem:[#allocation7] sm:$0xf]
    %v108 = vld [vmem:[#allocation7 + $0x4] sm:$0xf]
    %v109 = vld [vmem:[#allocation7 + $0x8] sm:$0xf]
    %v110 = vld [vmem:[#allocation7 + $0xc] sm:$0xf]
    %v111 = vld [vmem:[#allocation7 + $0x10] sm:$0xf]
    %v112 = vld [vmem:[#allocation7 + $0x14] sm:$0xf]
    %v113 = vld [vmem:[#allocation7 + $0x18] sm:$0xf]
    %v114 = vld [vmem:[#allocation7 + $0x1c] sm:$0xf]
    %v115 = vld [vmem:[#allocation7 + $0x20] sm:$0xf]
    %v116 = vld [vmem:[#allocation7 + $0x24] sm:$0xf]
    %v117 = vld [vmem:[#allocation7 + $0x28] sm:$0xf]
    %v118 = vld [vmem:[#allocation7 + $0x2c] sm:$0xf]
    %v119 = vld [vmem:[#allocation7 + $0x30] sm:$0xf]
    %v120 = vld [vmem:[#allocation7 + $0x34] sm:$0xf]
    %v121 = vld [vmem:[#allocation7 + $0x38] sm:$0xf]
    %v122 = vld [vmem:[#allocation7 + $0x3c] sm:$0xf]
    %v123 = vld [vmem:[%s5] sm:$0x1]
    %v124 = vld [vmem:[%s6] sm:$0x1]
    %v125 = vld [vmem:[%s7] sm:$0x3]
    %v126 = vlaneseq
    %v127 = vand.u32 %v126, 127
    %128 = vset.pattern.permute.xlu0 0
    %129 = vperm.xlu0 %128, %v74
    %v130 = vpop.permute.xlu0 %129
    %vm131 = vcmp.eq.s32.totalorder %v127, %v130
    %vm132 = vcmp.eq.s32.totalorder %v127, 12
    %vm133 = vmor %vm131, %vm132
    %v134 = vsel %vm133, 1, 0
    %v135 = vcvt.s32.f32 %v134
    %vm136 = vcmp.eq.s32.totalorder %v127, 10
    %vm137 = vcmp.eq.s32.totalorder %v127, 11
    %139 = vset.pattern.permute.xlu0 1
    %140 = vperm.xlu0 %139, %v73
    %v141 = vpop.permute.xlu0 %140
    %v143 = vsel %vm137, %v141, %v135
    %144 = vset.pattern.permute.xlu0 0
    %145 = vperm.xlu0 %144, %v73
    %v146 = vpop.permute.xlu0 %145
    %v148 = vsel %vm136, %v146, %v143
    %v149 = vpack.c.bf16 %v148, %v148
    %v166 = vunpack.c.l.b16 %v75
    %v167 = vunpack.c.h.b16 %v75
    %v168 = vunpack.c.l.b16 %v76
    %v169 = vunpack.c.h.b16 %v76
    %v170 = vunpack.c.l.b16 %v77
    %v171 = vunpack.c.h.b16 %v77
    %v172 = vunpack.c.l.b16 %v78
    %v173 = vunpack.c.h.b16 %v78
    %v174 = vunpack.c.l.b16 %v79
    %v175 = vunpack.c.h.b16 %v79
    %v176 = vunpack.c.l.b16 %v80
    %v177 = vunpack.c.h.b16 %v80
    %v178 = vunpack.c.l.b16 %v81
    %v179 = vunpack.c.h.b16 %v81
    %v180 = vunpack.c.l.b16 %v82
    %v181 = vunpack.c.h.b16 %v82
    %v182 = vunpack.c.l.b16 %v83
    %v183 = vunpack.c.h.b16 %v83
    %v184 = vunpack.c.l.b16 %v84
    %v185 = vunpack.c.h.b16 %v84
    %v186 = vunpack.c.l.b16 %v85
    %v187 = vunpack.c.h.b16 %v85
    %v188 = vunpack.c.l.b16 %v86
    %v189 = vunpack.c.h.b16 %v86
    %v190 = vunpack.c.l.b16 %v87
    %v191 = vunpack.c.h.b16 %v87
    %v192 = vunpack.c.l.b16 %v88
    %v193 = vunpack.c.h.b16 %v88
    %v194 = vunpack.c.l.b16 %v89
    %v195 = vunpack.c.h.b16 %v89
    %v196 = vunpack.c.l.b16 %v90
    %v197 = vunpack.c.h.b16 %v90
    %v198 = vpack.c.b16 %v168, %v166
    %v199 = vpack.c.b16 %v169, %v167
    %v200 = vpack.c.b16 %v172, %v170
    %v201 = vpack.c.b16 %v173, %v171
    %v202 = vpack.c.b16 %v176, %v174
    %v203 = vpack.c.b16 %v177, %v175
    %v204 = vpack.c.b16 %v180, %v178
    %v205 = vpack.c.b16 %v181, %v179
    %v206 = vpack.c.b16 %v184, %v182
    %v207 = vpack.c.b16 %v185, %v183
    %v208 = vpack.c.b16 %v188, %v186
    %v209 = vpack.c.b16 %v189, %v187
    %v210 = vpack.c.b16 %v192, %v190
    %v211 = vpack.c.b16 %v193, %v191
    %v212 = vpack.c.b16 %v196, %v194
    %v213 = vpack.c.b16 %v197, %v195
    %230 = vmatprep.subr.bf16.mxu0 %v213
    %231 = vmatpush1.bf16.msra.mxu0 %v212
    %232 = vmatprep.subr.bf16.mxu0 %v211
    %233 = vmatpush1.bf16.msra.mxu0 %v210
    %234 = vmatprep.subr.bf16.mxu0 %v209
    %235 = vmatpush1.bf16.msra.mxu0 %v208
    %236 = vmatprep.subr.bf16.mxu0 %v207
    %237 = vmatpush1.bf16.msra.mxu0 %v206
    %238 = vmatprep.subr.bf16.mxu0 %v205
    %239 = vmatpush1.bf16.msra.mxu0 %v204
    %240 = vmatprep.subr.bf16.mxu0 %v203
    %241 = vmatpush1.bf16.msra.mxu0 %v202
    %242 = vmatprep.subr.bf16.mxu0 %v201
    %243 = vmatpush1.bf16.msra.mxu0 %v200
    %244 = vmatprep.subr.bf16.mxu0 %v199
    %245 = vmatpush1.bf16.msra.mxu0 %v198
    %246 = vmatprep.subr.bf16.mxu0 0
    %247 = vmatpush2.bf16.msra.mxu0 0
    %248 = vmatprep.subr.bf16.mxu0 0
    %249 = vmatpush2.bf16.msra.mxu0 0
    %250 = vmatprep.subr.bf16.mxu0 0
    %251 = vmatpush2.bf16.msra.mxu0 0
    %252 = vmatprep.subr.bf16.mxu0 0
    %253 = vmatpush2.bf16.msra.mxu0 0
    %254 = vmatprep.subr.bf16.mxu0 0
    %255 = vmatpush2.bf16.msra.mxu0 0
    %256 = vmatprep.subr.bf16.mxu0 0
    %257 = vmatpush2.bf16.msra.mxu0 0
    %258 = vmatprep.subr.bf16.mxu0 0
    %259 = vmatpush2.bf16.msra.mxu0 0
    %260 = vmatprep.subr.bf16.mxu0 0
    %261 = vmatpush2.bf16.msra.mxu0 0
    %262 = vmatprep.mubr.bf16.mxu0 0
    %263 = vmatmul.mubr.bf16.gmra.mxu0 %v149
    %v264 = vpop.f32.mrf.mxu0
    %v265 = vadd.f32 0.0, %v264
    %v266 = vpop.f32.mrf.mxu0
    %v267 = vadd.f32 0.0, %v266
    %v268 = vpop.f32.mrf.mxu0
    %v269 = vpop.f32.mrf.mxu0
    %270 = vdwg.mxu0
    %v271 = vmul.f32 %v265, %v267
    %v272 = vand.u32 2147483647, %v271
    %v273 = vsub.f32 0.0, %v272
    %v274 = vpack.c.bf16 %v273, %v273
    %v276 = vmul.bf16 %v274, 1069105081
    %v277 = vpow.bf16.pop %v276
    %v278 = vadd.bf16 %v277, 1065369472
    %v279 = vlog2.bf16.pop %v278
    %v281 = vmul.bf16 %v279, 1060192049
    %v282 = vunpack.c.l.bf16 %v281
    %v283 = vmax.f32 %v271, 0.0
    %v284 = vadd.f32 %v283, %v282
    %v285 = vpack.c.bf16 %v284, %v284
    %v287 = vlaneseq
    %v288 = vshrl.u32 %v287, 7
    %v289 = vsub.s32 0, %v288
    %v290 = vrot.slane %v123, %v289
    %v308 = vunpack.c.l.b16 %v107
    %v309 = vunpack.c.l.b16 %v108
    %v310 = vunpack.c.l.b16 %v109
    %v311 = vunpack.c.l.b16 %v110
    %v312 = vunpack.c.l.b16 %v111
    %v313 = vunpack.c.l.b16 %v112
    %v314 = vunpack.c.l.b16 %v113
    %v315 = vunpack.c.l.b16 %v114
    %v316 = vunpack.c.l.b16 %v115
    %v317 = vunpack.c.l.b16 %v116
    %v318 = vunpack.c.l.b16 %v117
    %v319 = vunpack.c.l.b16 %v118
    %v320 = vunpack.c.l.b16 %v119
    %v321 = vunpack.c.l.b16 %v120
    %v322 = vunpack.c.l.b16 %v121
    %v323 = vunpack.c.l.b16 %v122
    %v324 = vpack.c.b16 %v309, %v308
    %v325 = vpack.c.b16 %v311, %v310
    %v326 = vpack.c.b16 %v313, %v312
    %v327 = vpack.c.b16 %v315, %v314
    %v328 = vpack.c.b16 %v317, %v316
    %v329 = vpack.c.b16 %v319, %v318
    %v330 = vpack.c.b16 %v321, %v320
    %v331 = vpack.c.b16 %v323, %v322
    %340 = vmatprep.subr.bf16.mxu0 0
    %341 = vmatpush1.bf16.msra.mxu0 %v331
    %342 = vmatprep.subr.bf16.mxu0 0
    %343 = vmatpush1.bf16.msra.mxu0 %v330
    %344 = vmatprep.subr.bf16.mxu0 0
    %345 = vmatpush1.bf16.msra.mxu0 %v329
    %346 = vmatprep.subr.bf16.mxu0 0
    %347 = vmatpush1.bf16.msra.mxu0 %v328
    %348 = vmatprep.subr.bf16.mxu0 0
    %349 = vmatpush1.bf16.msra.mxu0 %v327
    %350 = vmatprep.subr.bf16.mxu0 0
    %351 = vmatpush1.bf16.msra.mxu0 %v326
    %352 = vmatprep.subr.bf16.mxu0 0
    %353 = vmatpush1.bf16.msra.mxu0 %v325
    %354 = vmatprep.subr.bf16.mxu0 0
    %355 = vmatpush1.bf16.msra.mxu0 %v324
    %356 = vmatprep.subr.bf16.mxu0 0
    %357 = vmatpush2.bf16.msra.mxu0 0
    %358 = vmatprep.subr.bf16.mxu0 0
    %359 = vmatpush2.bf16.msra.mxu0 0
    %360 = vmatprep.subr.bf16.mxu0 0
    %361 = vmatpush2.bf16.msra.mxu0 0
    %362 = vmatprep.subr.bf16.mxu0 0
    %363 = vmatpush2.bf16.msra.mxu0 0
    %364 = vmatprep.subr.bf16.mxu0 0
    %365 = vmatpush2.bf16.msra.mxu0 0
    %366 = vmatprep.subr.bf16.mxu0 0
    %367 = vmatpush2.bf16.msra.mxu0 0
    %368 = vmatprep.subr.bf16.mxu0 0
    %369 = vmatpush2.bf16.msra.mxu0 0
    %370 = vmatprep.subr.bf16.mxu0 0
    %371 = vmatpush2.bf16.msra.mxu0 0
    %372 = vmatprep.mubr.bf16.mxu0 0
    %373 = vmatmul.mubr.bf16.gmra.mxu0 %v285
    %v374 = vpop.f32.mrf.mxu0
    %v375 = vadd.f32 %v290, %v374
    %v376 = vpop.f32.mrf.mxu0
    %v377 = vpop.f32.mrf.mxu0
    %v378 = vpop.f32.mrf.mxu0
    %379 = vdwg.mxu0
    %v396 = vunpack.c.l.b16 %v91
    %v397 = vunpack.c.l.b16 %v92
    %v398 = vunpack.c.l.b16 %v93
    %v399 = vunpack.c.l.b16 %v94
    %v400 = vunpack.c.l.b16 %v95
    %v401 = vunpack.c.l.b16 %v96
    %v402 = vunpack.c.l.b16 %v97
    %v403 = vunpack.c.l.b16 %v98
    %v404 = vunpack.c.l.b16 %v99
    %v405 = vunpack.c.l.b16 %v100
    %v406 = vunpack.c.l.b16 %v101
    %v407 = vunpack.c.l.b16 %v102
    %v408 = vunpack.c.l.b16 %v103
    %v409 = vunpack.c.l.b16 %v104
    %v410 = vunpack.c.l.b16 %v105
    %v411 = vunpack.c.l.b16 %v106
    %v412 = vpack.c.b16 %v397, %v396
    %v413 = vpack.c.b16 %v399, %v398
    %v414 = vpack.c.b16 %v401, %v400
    %v415 = vpack.c.b16 %v403, %v402
    %v416 = vpack.c.b16 %v405, %v404
    %v417 = vpack.c.b16 %v407, %v406
    %v418 = vpack.c.b16 %v409, %v408
    %v419 = vpack.c.b16 %v411, %v410
    %428 = vmatprep.subr.bf16.mxu0 0
    %429 = vmatpush1.bf16.msra.mxu0 %v419
    %430 = vmatprep.subr.bf16.mxu0 0
    %431 = vmatpush1.bf16.msra.mxu0 %v418
    %432 = vmatprep.subr.bf16.mxu0 0
    %433 = vmatpush1.bf16.msra.mxu0 %v417
    %434 = vmatprep.subr.bf16.mxu0 0
    %435 = vmatpush1.bf16.msra.mxu0 %v416
    %436 = vmatprep.subr.bf16.mxu0 0
    %437 = vmatpush1.bf16.msra.mxu0 %v415
    %438 = vmatprep.subr.bf16.mxu0 0
    %439 = vmatpush1.bf16.msra.mxu0 %v414
    %440 = vmatprep.subr.bf16.mxu0 0
    %441 = vmatpush1.bf16.msra.mxu0 %v413
    %442 = vmatprep.subr.bf16.mxu0 0
    %443 = vmatpush1.bf16.msra.mxu0 %v412
    %444 = vmatprep.subr.bf16.mxu0 0
    %445 = vmatpush2.bf16.msra.mxu0 0
    %446 = vmatprep.subr.bf16.mxu0 0
    %447 = vmatpush2.bf16.msra.mxu0 0
    %448 = vmatprep.subr.bf16.mxu0 0
    %449 = vmatpush2.bf16.msra.mxu0 0
    %450 = vmatprep.subr.bf16.mxu0 0
    %451 = vmatpush2.bf16.msra.mxu0 0
    %452 = vmatprep.subr.bf16.mxu0 0
    %453 = vmatpush2.bf16.msra.mxu0 0
    %454 = vmatprep.subr.bf16.mxu0 0
    %455 = vmatpush2.bf16.msra.mxu0 0
    %456 = vmatprep.subr.bf16.mxu0 0
    %457 = vmatpush2.bf16.msra.mxu0 0
    %458 = vmatprep.subr.bf16.mxu0 0
    %459 = vmatpush2.bf16.msra.mxu0 0
    %460 = vmatprep.mubr.bf16.mxu0 0
    %461 = vmatmul.mubr.bf16.gmra.mxu0 %v149
    %v462 = vpop.f32.mrf.mxu0
    %v463 = vadd.f32 0.0, %v462
    %v464 = vpop.f32.mrf.mxu0
    %v465 = vpop.f32.mrf.mxu0
    %v466 = vpop.f32.mrf.mxu0
    %467 = vdwg.mxu0
    %v468 = vmul.f32 %v463, %v375
    %v469 = vand.u32 2147483647, %v468
    %v470 = vsub.f32 0.0, %v469
    %v471 = vpack.c.bf16 %v470, %v470
    %v473 = vmul.bf16 %v471, 1069105081
    %v474 = vpow.bf16.pop %v473
    %v475 = vadd.bf16 %v474, 1065369472
    %v476 = vlog2.bf16.pop %v475
    %v478 = vmul.bf16 %v476, 1060192049
    %v479 = vunpack.c.l.bf16 %v478
    %v480 = vmax.f32 %v468, 0.0
    %v481 = vadd.f32 %v480, %v479
    %v482 = vpack.c.bf16 %v481, %v481
    %484 = vset.pattern.permute.xlu0 0
    %485 = vperm.xlu0 %484, %v125
    %v486 = vpop.permute.xlu0 %485
    %488 = vmatprep.subr.bf16.mxu0 0
    %489 = vmatpush1.bf16.xpose.msra.mxu0 0
    %490 = vmatprep.subr.bf16.mxu0 0
    %491 = vmatpush1.bf16.xpose.msra.mxu0 0
    %492 = vmatprep.subr.bf16.mxu0 0
    %493 = vmatpush1.bf16.xpose.msra.mxu0 0
    %494 = vmatprep.subr.bf16.mxu0 0
    %495 = vmatpush1.bf16.xpose.msra.mxu0 0
    %496 = vmatprep.subr.bf16.mxu0 0
    %497 = vmatpush1.bf16.xpose.msra.mxu0 0
    %498 = vmatprep.subr.bf16.mxu0 0
    %499 = vmatpush1.bf16.xpose.msra.mxu0 0
    %500 = vmatprep.subr.bf16.mxu0 0
    %501 = vmatpush1.bf16.xpose.msra.mxu0 0
    %502 = vmatprep.subr.bf16.mxu0 0
    %503 = vmatpush1.bf16.xpose.msra.mxu0 %v482
    %504 = vmatprep.subr.bf16.mxu0 0
    %505 = vmatpush2.bf16.xpose.msra.mxu0 0
    %506 = vmatprep.subr.bf16.mxu0 0
    %507 = vmatpush2.bf16.xpose.msra.mxu0 0
    %508 = vmatprep.subr.bf16.mxu0 0
    %509 = vmatpush2.bf16.xpose.msra.mxu0 0
    %510 = vmatprep.subr.bf16.mxu0 0
    %511 = vmatpush2.bf16.xpose.msra.mxu0 0
    %512 = vmatprep.subr.bf16.mxu0 0
    %513 = vmatpush2.bf16.xpose.msra.mxu0 0
    %514 = vmatprep.subr.bf16.mxu0 0
    %515 = vmatpush2.bf16.xpose.msra.mxu0 0
    %516 = vmatprep.subr.bf16.mxu0 0
    %517 = vmatpush2.bf16.xpose.msra.mxu0 0
    %518 = vmatprep.subr.bf16.mxu0 0
    %519 = vmatpush2.bf16.xpose.msra.mxu0 0
    %520 = vmatprep.mubr.bf16.mxu0 0
    %521 = vmatmul.mubr.bf16.gmra.mxu0 %v124
    %v522 = vpop.f32.mrf.mxu0
    %v523 = vadd.f32 %v486, %v522
    %v524 = vpop.f32.mrf.mxu0
    %v525 = vpop.f32.mrf.mxu0
    %v526 = vpop.f32.mrf.mxu0
    %527 = vdwg.mxu0
    %vm528 = vcmask 58368
    %529 = vst.msk [vmem:[#allocation8] sm:$0x3] %vm528, %v523
    // Predicated region
    $region46: #{tpu_custom_call.1} parent=1 // pred_check
      _
    $region47: #{tpu_custom_call.1} parent=1 // pred_check_branch
      %531 = sbr.rel (0) target = $region49
    $region48: #{tpu_custom_call.1} parent=1 // pred_region
      %s533 = ssub.s32 32, 32
      %534 = vsyncadd [#allocation4], %s533
      %s536 = sshll.u32 [#allocation8], 4
      %s537 = int_to_ptr.vmem [resolvable:$true] %s536
      %539 = dma.vmem_to_hbm [thread:$0]  %s537, 32, %s8, [#allocation4]
    $region49: #{tpu_custom_call.1} parent=1 // pred_fallthru
      _
    // Predicated region
    $region50: #{tpu_custom_call.1} parent=1 // pred_check
      _
    $region51: #{tpu_custom_call.1} parent=1 // pred_check_branch
      %541 = sbr.rel (0) target = $region53
    $region52: #{tpu_custom_call.1} parent=1 // pred_region
      %542 = dma.done [#allocation4], 32
    $region53: #{tpu_custom_call.1} parent=1 // pred_fallthru
      _
    %543 = vsyncpa [#allocation3], 1
    %544 = vsyncpa [#allocation6], 1
    %545 = vsyncpa [#allocation4], 1

</llo_original>
